<compile_context>
chip_gen: v5e
topology: v5e:2x2
jax: 0.10.0
libtpu: 0.0.40
codegen_flags: <defaults>
</compile_context>

<pallas_src>
import jax
import jax.numpy as jnp
from jax import lax
from jax.experimental import pallas as pl
from jax.experimental.pallas import tpu as pltpu


def _im2col_k3(a):
    """a: (Nb, L, C) -> (Nb*L, 3*C) sliding k=3 windows, zero-padded per sample.

    Column layout is [prev-channels | mid-channels | next-channels], matching
    the (3*Cin, Cout) weight layout produced by _im2col_weight.
    """
    Nb, L, C = a.shape
    z = jnp.zeros((Nb, 1, C), a.dtype)
    ap = jnp.concatenate([z, a, z], axis=1)                      # (Nb, L+2, C)
    cat = jnp.concatenate(
        [ap[:, 0:L], ap[:, 1:L + 1], ap[:, 2:L + 2]], axis=-1)   # (Nb, L, 3C)
    return cat.reshape(Nb * L, 3 * C)


def cnn_decoder_kernel(x_ref, w1_ref, b1_ref, w2_ref, b2_ref, w3_ref, b3_ref,
                       out_ref):
    Nb, L, _ = x_ref.shape
    x = x_ref[...]                                               # (Nb, L, Cin) bf16

    def conv_layer(a, w_ref, b_ref):
        # One fused MXU matmul per conv layer, f32 accumulation.
        y = jnp.dot(_im2col_k3(a), w_ref[...],
                    preferred_element_type=jnp.float32)
        return y + b_ref[...]                                    # (Nb*L, Cout) f32

    y1 = jnp.maximum(conv_layer(x, w1_ref, b1_ref), 0.0)         # ReLU
    y1 = y1.astype(jnp.bfloat16).reshape(Nb, L, -1)              # (Nb, L, 16)
    y2 = jnp.maximum(conv_layer(y1, w2_ref, b2_ref), 0.0)        # ReLU
    y2 = y2.astype(jnp.bfloat16).reshape(Nb, L, -1)              # (Nb, L, 128)
    y3 = jax.nn.sigmoid(conv_layer(y2, w3_ref, b3_ref))          # Sigmoid, f32
    out_ref[...] = y3.reshape(Nb, L, -1).astype(out_ref.dtype)   # (Nb, L, Cout_pad)


def _im2col_weight(w):
    """PyTorch Conv1d weight (Cout, Cin, 3) -> im2col matrix (3*Cin, Cout), bf16."""
    cout, cin, k = w.shape
    return jnp.transpose(w, (2, 1, 0)).reshape(k * cin, cout).astype(jnp.bfloat16)


def cnn_decoder_forward(x_ncl, params, *, block_batch=None):
    """x_ncl: (N, Cin, L); params: PyTorch-layout weights. Returns (N, Cout, L)."""
    N, Cin, L = x_ncl.shape
    w1, b1 = params["w1"], params["b1"]        # (16, Cin, 3), (16,)
    w2, b2 = params["w2"], params["b2"]        # (128, 16, 3), (128,)
    w3, b3 = params["w3"], params["b3"]        # (Cout, 128, 3), (Cout,)
    Cout = w3.shape[0]
    Cout_pad = ((Cout + 127) // 128) * 128     # lane-dense output stores

    # NCL -> NLC; bf16 operands into the kernel (f32 accumulation inside).
    x_nlc = jnp.transpose(x_ncl, (0, 2, 1)).astype(jnp.bfloat16)

    w1f = _im2col_weight(w1)                                   # (3*Cin, 16)
    w2f = _im2col_weight(w2)                                   # (48, 128)
    w3p = jnp.pad(w3, ((0, Cout_pad - Cout), (0, 0), (0, 0)))  # zero out-channels
    b3p = jnp.pad(b3, (0, Cout_pad - Cout))
    w3f = _im2col_weight(w3p)                                  # (384, Cout_pad)
    b1r = b1.reshape(1, -1).astype(jnp.float32)
    b2r = b2.reshape(1, -1).astype(jnp.float32)
    b3r = b3p.reshape(1, -1).astype(jnp.float32)

    # Block several batch samples per grid step (largest divisor of N <= 8):
    # amortizes per-step overhead while keeping a "parallel" batch axis for
    # megacore / v7x when N is large.
    if block_batch is None:
        block_batch = max(d for d in range(1, min(N, 8) + 1) if N % d == 0)
    Nb = block_batch
    assert N % Nb == 0

    full = lambda a: pl.BlockSpec(a.shape, lambda i: (0,) * a.ndim)

    out_nlc = pl.pallas_call(
        cnn_decoder_kernel,
        out_shape=jax.ShapeDtypeStruct((N, L, Cout_pad), jnp.float32),
        grid_spec=pltpu.PrefetchScalarGridSpec(
            num_scalar_prefetch=0,
            grid=(N // Nb,),
            in_specs=[
                pl.BlockSpec((Nb, L, Cin), lambda i: (i, 0, 0)),
                full(w1f), full(b1r),
                full(w2f), full(b2r),
                full(w3f), full(b3r),
            ],
            out_specs=pl.BlockSpec((Nb, L, Cout_pad), lambda i: (i, 0, 0)),
        ),
        compiler_params=pltpu.CompilerParams(
            dimension_semantics=("parallel",)),
    )(x_nlc, w1f, b1r, w2f, b2r, w3f, b3r)

    # Drop lane padding and go back to NCL (fuses into one XLA op).
    return jnp.transpose(out_nlc[:, :, :Cout], (0, 2, 1))


def init_params(key, hidden_size1, hidden_size3):
    """Deterministic synthetic init mimicking Conv1d's uniform(-1/sqrt(fan_in*k))."""
    def conv_init(k, cout, cin):
        kw, kb = jax.random.split(k)
        bound = 1.0 / jnp.sqrt(cin * 3.0)
        w = jax.random.uniform(kw, (cout, cin, 3), jnp.float32, -bound, bound)
        b = jax.random.uniform(kb, (cout,), jnp.float32, -bound, bound)
        return w, b

    k1, k2, k3 = jax.random.split(key, 3)
    w1, b1 = conv_init(k1, 16, hidden_size3)
    w2, b2 = conv_init(k2, 128, 16)
    w3, b3 = conv_init(k3, hidden_size1, 128)
    return {"w1": w1, "b1": b1, "w2": w2, "b2": b2, "w3": w3, "b3": b3}


def reference_forward(x_ncl, params):
    """Pure-JAX reference matching nn.Conv1d semantics, with conv operands
    rounded to bf16 to mirror the kernel's MXU input precision (f32 accum)."""
    bf = lambda a: a.astype(jnp.bfloat16).astype(jnp.float32)

    def conv(x, w, b):
        y = lax.conv_general_dilated(
            bf(x), bf(w), window_strides=(1,), padding=((1, 1),),
            dimension_numbers=("NCH", "OIH", "NCH"),
            preferred_element_type=jnp.float32)
        return y + b[None, :, None].astype(jnp.float32)

    y = jax.nn.relu(conv(x_ncl, params["w1"], params["b1"]))
    y = jax.nn.relu(conv(y, params["w2"], params["b2"]))
    return jax.nn.sigmoid(conv(y, params["w3"], params["b3"]))


if __name__ == "__main__":
    hidden_size1 = 32   # output channels
    hidden_size3 = 8    # input channels
    N, L = 2, 16

    key = jax.random.PRNGKey(0)
    kx, kp = jax.random.split(key)
    x = jax.random.normal(kx, (N, hidden_size3, L), jnp.float32)
    params = init_params(kp, hidden_size1, hidden_size3)

    out = jax.block_until_ready(cnn_decoder_forward(x, params))
    ref = jax.block_until_ready(reference_forward(x, params))

    assert out.shape == (N, hidden_size1, L)
    err = jnp.max(jnp.abs(out - ref))
    assert jnp.allclose(out, ref, atol=1e-4, rtol=1e-4), f"max abs err {err}"

    print("KERNEL_OK")
</pallas_src>

<mosaic_0001>
module attributes {stable_mosaic.version = 11 : i64} {
  func.func @cnn_decoder_kernel(%arg0: i32, %arg1: memref<2x16x8xbf16, #tpu.memory_space<vmem>>, %arg2: memref<24x16xbf16, #tpu.memory_space<vmem>>, %arg3: memref<1x16xf32, #tpu.memory_space<vmem>>, %arg4: memref<48x128xbf16, #tpu.memory_space<vmem>>, %arg5: memref<1x128xf32, #tpu.memory_space<vmem>>, %arg6: memref<384x128xbf16, #tpu.memory_space<vmem>>, %arg7: memref<1x128xf32, #tpu.memory_space<vmem>>, %arg8: memref<2x16x128xf32, #tpu.memory_space<vmem>>) attributes {dimension_semantics = [#tpu.dimension_semantics<parallel>], iteration_bounds = array<i64: 1>, scalar_prefetch = 0 : i64, scratch_operands = 0 : i64, tpu.core_type = #tpu.core_type<tc>, window_params = [{transform_indices = @transform_0, window_bounds = array<i64: 2, 16, 8>}, {pipeline_mode = #tpu.pipeline_mode<synchronous>, transform_indices = @transform_1, window_bounds = array<i64: 24, 16>}, {pipeline_mode = #tpu.pipeline_mode<synchronous>, transform_indices = @transform_2, window_bounds = array<i64: 1, 16>}, {pipeline_mode = #tpu.pipeline_mode<synchronous>, transform_indices = @transform_3, window_bounds = array<i64: 48, 128>}, {pipeline_mode = #tpu.pipeline_mode<synchronous>, transform_indices = @transform_4, window_bounds = array<i64: 1, 128>}, {pipeline_mode = #tpu.pipeline_mode<synchronous>, transform_indices = @transform_5, window_bounds = array<i64: 384, 128>}, {pipeline_mode = #tpu.pipeline_mode<synchronous>, transform_indices = @transform_6, window_bounds = array<i64: 1, 128>}, {transform_indices = @transform_7, window_bounds = array<i64: 2, 16, 128>}]} {
    %c0 = arith.constant 0 : index
    %c0_0 = arith.constant 0 : index
    %c0_1 = arith.constant 0 : index
    %0 = vector.load %arg1[%c0, %c0_0, %c0_1] : memref<2x16x8xbf16, #tpu.memory_space<vmem>>, vector<2x16x8xbf16>
    %cst = arith.constant 0.000000e+00 : bf16
    %1 = vector.broadcast %cst : bf16 to vector<2x1x8xbf16>
    %2 = tpu.concatenate %1, %0, %1 in 1 : vector<2x1x8xbf16>, vector<2x16x8xbf16>, vector<2x1x8xbf16> -> vector<2x18x8xbf16>
    %3 = vector.extract_strided_slice %2 {offsets = [0, 0, 0], sizes = [2, 16, 8], strides = [1, 1, 1]} : vector<2x18x8xbf16> to vector<2x16x8xbf16>
    %4 = vector.extract_strided_slice %2 {offsets = [0, 1, 0], sizes = [2, 16, 8], strides = [1, 1, 1]} : vector<2x18x8xbf16> to vector<2x16x8xbf16>
    %5 = vector.extract_strided_slice %2 {offsets = [0, 2, 0], sizes = [2, 16, 8], strides = [1, 1, 1]} : vector<2x18x8xbf16> to vector<2x16x8xbf16>
    %6 = tpu.concatenate %3, %4, %5 in 2 : vector<2x16x8xbf16>, vector<2x16x8xbf16>, vector<2x16x8xbf16> -> vector<2x16x24xbf16>
    %7 = vector.shape_cast %6 : vector<2x16x24xbf16> to vector<32x24xbf16>
    %c0_2 = arith.constant 0 : index
    %c0_3 = arith.constant 0 : index
    %8 = vector.load %arg2[%c0_2, %c0_3] : memref<24x16xbf16, #tpu.memory_space<vmem>>, vector<24x16xbf16>
    %cst_4 = arith.constant dense<0.000000e+00> : vector<32x16xf32>
    %9 = tpu.matmul %7, %8, %cst_4 {dimension_numbers = #tpu.dot_dimension_numbers<[1], [0], [0], [1], [0, 0, 1, 1], [], []>} : vector<32x24xbf16>, vector<24x16xbf16>, vector<32x16xf32> -> vector<32x16xf32>
    %c0_5 = arith.constant 0 : index
    %c0_6 = arith.constant 0 : index
    %10 = vector.load %arg3[%c0_5, %c0_6] : memref<1x16xf32, #tpu.memory_space<vmem>>, vector<1x16xf32>
    %11 = vector.broadcast %10 : vector<1x16xf32> to vector<32x16xf32>
    %12 = arith.addf %9, %11 : vector<32x16xf32>
    %cst_7 = arith.constant 0.000000e+00 : f32
    %13 = vector.broadcast %cst_7 : f32 to vector<32x16xf32>
    %14 = arith.maximumf %12, %13 : vector<32x16xf32>
    %15 = arith.truncf %14 : vector<32x16xf32> to vector<32x16xbf16>
    %16 = vector.shape_cast %15 : vector<32x16xbf16> to vector<2x16x16xbf16>
    %cst_8 = arith.constant 0.000000e+00 : bf16
    %17 = vector.broadcast %cst_8 : bf16 to vector<2x1x16xbf16>
    %18 = tpu.concatenate %17, %16, %17 in 1 : vector<2x1x16xbf16>, vector<2x16x16xbf16>, vector<2x1x16xbf16> -> vector<2x18x16xbf16>
    %19 = vector.extract_strided_slice %18 {offsets = [0, 0, 0], sizes = [2, 16, 16], strides = [1, 1, 1]} : vector<2x18x16xbf16> to vector<2x16x16xbf16>
    %20 = vector.extract_strided_slice %18 {offsets = [0, 1, 0], sizes = [2, 16, 16], strides = [1, 1, 1]} : vector<2x18x16xbf16> to vector<2x16x16xbf16>
    %21 = vector.extract_strided_slice %18 {offsets = [0, 2, 0], sizes = [2, 16, 16], strides = [1, 1, 1]} : vector<2x18x16xbf16> to vector<2x16x16xbf16>
    %22 = tpu.concatenate %19, %20, %21 in 2 : vector<2x16x16xbf16>, vector<2x16x16xbf16>, vector<2x16x16xbf16> -> vector<2x16x48xbf16>
    %23 = vector.shape_cast %22 : vector<2x16x48xbf16> to vector<32x48xbf16>
    %c0_9 = arith.constant 0 : index
    %c0_10 = arith.constant 0 : index
    %24 = vector.load %arg4[%c0_9, %c0_10] : memref<48x128xbf16, #tpu.memory_space<vmem>>, vector<48x128xbf16>
    %cst_11 = arith.constant dense<0.000000e+00> : vector<32x128xf32>
    %25 = tpu.matmul %23, %24, %cst_11 {dimension_numbers = #tpu.dot_dimension_numbers<[1], [0], [0], [1], [0, 0, 1, 1], [], []>} : vector<32x48xbf16>, vector<48x128xbf16>, vector<32x128xf32> -> vector<32x128xf32>
    %c0_12 = arith.constant 0 : index
    %c0_13 = arith.constant 0 : index
    %26 = vector.load %arg5[%c0_12, %c0_13] : memref<1x128xf32, #tpu.memory_space<vmem>>, vector<1x128xf32>
    %27 = vector.broadcast %26 : vector<1x128xf32> to vector<32x128xf32>
    %28 = arith.addf %25, %27 : vector<32x128xf32>
    %cst_14 = arith.constant 0.000000e+00 : f32
    %29 = vector.broadcast %cst_14 : f32 to vector<32x128xf32>
    %30 = arith.maximumf %28, %29 : vector<32x128xf32>
    %31 = arith.truncf %30 : vector<32x128xf32> to vector<32x128xbf16>
    %32 = vector.shape_cast %31 : vector<32x128xbf16> to vector<2x16x128xbf16>
    %cst_15 = arith.constant 0.000000e+00 : bf16
    %33 = vector.broadcast %cst_15 : bf16 to vector<2x1x128xbf16>
    %34 = tpu.concatenate %33, %32, %33 in 1 : vector<2x1x128xbf16>, vector<2x16x128xbf16>, vector<2x1x128xbf16> -> vector<2x18x128xbf16>
    %35 = vector.extract_strided_slice %34 {offsets = [0, 0, 0], sizes = [2, 16, 128], strides = [1, 1, 1]} : vector<2x18x128xbf16> to vector<2x16x128xbf16>
    %36 = vector.extract_strided_slice %34 {offsets = [0, 1, 0], sizes = [2, 16, 128], strides = [1, 1, 1]} : vector<2x18x128xbf16> to vector<2x16x128xbf16>
    %37 = vector.extract_strided_slice %34 {offsets = [0, 2, 0], sizes = [2, 16, 128], strides = [1, 1, 1]} : vector<2x18x128xbf16> to vector<2x16x128xbf16>
    %38 = tpu.concatenate %35, %36, %37 in 2 : vector<2x16x128xbf16>, vector<2x16x128xbf16>, vector<2x16x128xbf16> -> vector<2x16x384xbf16>
    %39 = vector.shape_cast %38 : vector<2x16x384xbf16> to vector<32x384xbf16>
    %c0_16 = arith.constant 0 : index
    %c0_17 = arith.constant 0 : index
    %40 = vector.load %arg6[%c0_16, %c0_17] : memref<384x128xbf16, #tpu.memory_space<vmem>>, vector<384x128xbf16>
    %cst_18 = arith.constant dense<0.000000e+00> : vector<32x128xf32>
    %41 = tpu.matmul %39, %40, %cst_18 {dimension_numbers = #tpu.dot_dimension_numbers<[1], [0], [0], [1], [0, 0, 1, 1], [], []>} : vector<32x384xbf16>, vector<384x128xbf16>, vector<32x128xf32> -> vector<32x128xf32>
    %c0_19 = arith.constant 0 : index
    %c0_20 = arith.constant 0 : index
    %42 = vector.load %arg7[%c0_19, %c0_20] : memref<1x128xf32, #tpu.memory_space<vmem>>, vector<1x128xf32>
    %43 = vector.broadcast %42 : vector<1x128xf32> to vector<32x128xf32>
    %44 = arith.addf %41, %43 : vector<32x128xf32>
    %45 = arith.negf %44 : vector<32x128xf32>
    %46 = math.exp %45 : vector<32x128xf32>
    %cst_21 = arith.constant 1.000000e+00 : f32
    %47 = vector.broadcast %cst_21 : f32 to vector<32x128xf32>
    %48 = arith.addf %47, %46 : vector<32x128xf32>
    %49 = arith.divf %47, %48 : vector<32x128xf32>
    %50 = vector.shape_cast %49 : vector<32x128xf32> to vector<2x16x128xf32>
    %c0_22 = arith.constant 0 : index
    %c0_23 = arith.constant 0 : index
    %c0_24 = arith.constant 0 : index
    %51 = vector.load %arg8[%c0_22, %c0_23, %c0_24] : memref<2x16x128xf32, #tpu.memory_space<vmem>>, vector<2x16x128xf32>
    tpu.vector_store %arg8[%c0_22, %c0_23, %c0_24], %50 {strides = array<i32>} : memref<2x16x128xf32, #tpu.memory_space<vmem>>, vector<2x16x128xf32>,
    return
  }
  func.func @transform_0(%arg0: i32) -> (i32, i32, i32) {
    %c0_i32 = arith.constant 0 : i32
    %c0_i32_0 = arith.constant 0 : i32
    %c0_i32_1 = arith.constant 0 : i32
    return %arg0, %c0_i32, %c0_i32_0 : i32, i32, i32
  }
  func.func @transform_1(%arg0: i32) -> (i32, i32) {
    %c0_i32 = arith.constant 0 : i32
    %c0_i32_0 = arith.constant 0 : i32
    %c0_i32_1 = arith.constant 0 : i32
    return %c0_i32, %c0_i32_0 : i32, i32
  }
  func.func @transform_2(%arg0: i32) -> (i32, i32) {
    %c0_i32 = arith.constant 0 : i32
    %c0_i32_0 = arith.constant 0 : i32
    %c0_i32_1 = arith.constant 0 : i32
    return %c0_i32, %c0_i32_0 : i32, i32
  }
  func.func @transform_3(%arg0: i32) -> (i32, i32) {
    %c0_i32 = arith.constant 0 : i32
    %c0_i32_0 = arith.constant 0 : i32
    %c0_i32_1 = arith.constant 0 : i32
    return %c0_i32, %c0_i32_0 : i32, i32
  }
  func.func @transform_4(%arg0: i32) -> (i32, i32) {
    %c0_i32 = arith.constant 0 : i32
    %c0_i32_0 = arith.constant 0 : i32
    %c0_i32_1 = arith.constant 0 : i32
    return %c0_i32, %c0_i32_0 : i32, i32
  }
  func.func @transform_5(%arg0: i32) -> (i32, i32) {
    %c0_i32 = arith.constant 0 : i32
    %c0_i32_0 = arith.constant 0 : i32
    %c0_i32_1 = arith.constant 0 : i32
    return %c0_i32, %c0_i32_0 : i32, i32
  }
  func.func @transform_6(%arg0: i32) -> (i32, i32) {
    %c0_i32 = arith.constant 0 : i32
    %c0_i32_0 = arith.constant 0 : i32
    %c0_i32_1 = arith.constant 0 : i32
    return %c0_i32, %c0_i32_0 : i32, i32
  }
  func.func @transform_7(%arg0: i32) -> (i32, i32, i32) {
    %c0_i32 = arith.constant 0 : i32
    %c0_i32_0 = arith.constant 0 : i32
    %c0_i32_1 = arith.constant 0 : i32
    return %arg0, %c0_i32, %c0_i32_0 : i32, i32, i32
  }
}

</mosaic_0001>

<llo_original>
// kernel: tpu_custom_call.1
$region0: #{tpu_custom_call.1}
  #allocation0 [shape = 'u32[]', space=smem, size = 0x4, offset = 0x4, fixed_abs, tag = 'smem constant byte address 0x4 - core index']
  #allocation1 [shape = 'u32[72,128]{1,0:T(1,128)}', space=vmem, size = 0x9000, scoped, tag = 'internal scratch']
  %s0 = inlined_call_operand.vmem [shape: bf16[2,16,8], index: 0, kind: input, shape index: {}]
  %s1 = inlined_call_operand.vmem [shape: bf16[24,16], index: 1, kind: input, shape index: {}]
  %s2 = inlined_call_operand.vmem [shape: f32[1,16], index: 2, kind: input, shape index: {}]
  %s3 = inlined_call_operand.vmem [shape: bf16[48,128], index: 3, kind: input, shape index: {}]
  %s4 = inlined_call_operand.vmem [shape: f32[1,128], index: 4, kind: input, shape index: {}]
  %s5 = inlined_call_operand.hbm [shape: bf16[384,128], index: 5, kind: input, shape index: {}]
  %s6 = inlined_call_operand.vmem [shape: f32[1,128], index: 6, kind: input, shape index: {}]
  %s7 = inlined_call_operand.hbm [shape: f32[2,16,128], index: 7, kind: output, shape index: {}]
  %s8 = sld [smem:[#allocation0]]
  $region42: #{tpu_custom_call.1} parent=0
    _
  %s10 = ssub.s32 1, %s8
  %s11 = scalar_select 0, %s10, %s8
  $region1: #{tpu_custom_call.1} parent=0
    #allocation2 [shape = 'u8[98304]{0}', space=vmem, size = 0x18000, scoped, tag = 'input window, operand 5, single buffered']
    #allocation3 [shape = 's32[1]{0}', space=sflag, size = 0x4, scoped, tag = 'scoped memory for tpu_custom_call.1']
    #allocation4 [shape = 's32[1]{0}', space=sflag, size = 0x4, scoped, tag = 'scoped memory for tpu_custom_call.1']
    #allocation5 [shape = 'u8[16384]{0}', space=vmem, size = 0x4000, scoped, tag = 'output window, operand 0, single buffered']
    %12 = vsyncpa [#allocation3], 0
    %13 = vsyncpa [#allocation4], 0
    // Predicated region
    $region2: #{tpu_custom_call.1} parent=1 // pred_check
      _
    $region3: #{tpu_custom_call.1} parent=1 // pred_check_branch
      %15 = sbr.rel (0) target = $region5
    $region4: #{tpu_custom_call.1} parent=1 // pred_region
      _
    $region5: #{tpu_custom_call.1} parent=1 // pred_fallthru
      _
    // Predicated region
    $region6: #{tpu_custom_call.1} parent=1 // pred_check
      _
    $region7: #{tpu_custom_call.1} parent=1 // pred_check_branch
      %17 = sbr.rel (0) target = $region9
    $region8: #{tpu_custom_call.1} parent=1 // pred_region
      _
    $region9: #{tpu_custom_call.1} parent=1 // pred_fallthru
      _
    // Predicated region
    $region10: #{tpu_custom_call.1} parent=1 // pred_check
      _
    $region11: #{tpu_custom_call.1} parent=1 // pred_check_branch
      %19 = sbr.rel (0) target = $region13
    $region12: #{tpu_custom_call.1} parent=1 // pred_region
      _
    $region13: #{tpu_custom_call.1} parent=1 // pred_fallthru
      _
    // Predicated region
    $region14: #{tpu_custom_call.1} parent=1 // pred_check
      _
    $region15: #{tpu_custom_call.1} parent=1 // pred_check_branch
      %21 = sbr.rel (0) target = $region17
    $region16: #{tpu_custom_call.1} parent=1 // pred_region
      _
    $region17: #{tpu_custom_call.1} parent=1 // pred_fallthru
      _
    // Predicated region
    $region18: #{tpu_custom_call.1} parent=1 // pred_check
      _
    $region19: #{tpu_custom_call.1} parent=1 // pred_check_branch
      %23 = sbr.rel (0) target = $region21
    $region20: #{tpu_custom_call.1} parent=1 // pred_region
      _
    $region21: #{tpu_custom_call.1} parent=1 // pred_fallthru
      _
    // Predicated region
    $region22: #{tpu_custom_call.1} parent=1 // pred_check
      _
    $region23: #{tpu_custom_call.1} parent=1 // pred_check_branch
      %25 = sbr.rel (0) target = $region25
    $region24: #{tpu_custom_call.1} parent=1 // pred_region
      %27 = vsyncadd [#allocation3], 0
      %s28 = sshll.u32 %s5, 4
      %s29 = int_to_ptr.hbm [resolvable:$true] %s28
      %s30 = sshll.u32 [#allocation2], 4
      %s31 = int_to_ptr.vmem [resolvable:$true] %s30
      %36 = dma.hbm_to_vmem [thread:$0]  %s29, 3072, %s31, [#allocation3], 64, 64, 4
    $region25: #{tpu_custom_call.1} parent=1 // pred_fallthru
      _
    // Predicated region
    $region26: #{tpu_custom_call.1} parent=1 // pred_check
      _
    $region27: #{tpu_custom_call.1} parent=1 // pred_check_branch
      %38 = sbr.rel (0) target = $region29
    $region28: #{tpu_custom_call.1} parent=1 // pred_region
      _
    $region29: #{tpu_custom_call.1} parent=1 // pred_fallthru
      _
    // Predicated region
    $region30: #{tpu_custom_call.1} parent=1 // pred_check
      _
    $region31: #{tpu_custom_call.1} parent=1 // pred_check_branch
      %40 = sbr.rel (0) target = $region33
    $region32: #{tpu_custom_call.1} parent=1 // pred_region
      %42 = dma.done [#allocation3], 3072
    $region33: #{tpu_custom_call.1} parent=1 // pred_fallthru
      _
    %v44 = vld [vmem:[%s0] sm:$0xf]
    %v45 = vld [vmem:[%s0 + $0x4] sm:$0xf]
    %v46 = vld [vmem:[%s0 + $0x8] sm:$0xf]
    %v47 = vld [vmem:[%s0 + $0xc] sm:$0xf]
    %v52 = vunpack.c.l.b16 %v44
    %v53 = vunpack.c.l.b16 %v45
    %v54 = vunpack.c.l.b16 %v46
    %v55 = vunpack.c.l.b16 %v47
    %v56 = vpack.c.b16 %v53, %v52
    %v57 = vpack.c.b16 %v55, %v54
    %v59 = vshrl.u32 %v56, 16
    %v61 = vrot.slane %v59, 7
    %v62 = vshll.u32 %v56, 16
    %v64 = vor.u32 %v61, %v62
    %v66 = vshrl.u32 %v57, 16
    %v68 = vrot.slane %v66, 7
    %v69 = vshll.u32 %v57, 16
    %v71 = vor.u32 %v68, %v69
    %vm76 = vcmask 1040384
    %vm77 = vsmask.f32 256
    %vm78 = vmand %vm76, %vm77
    %v79 = vsel %vm78, 0, %v64
    %v80 = vsel %vm78, 0, %v71
    %v81 = vsel %vm78, %v61, 0
    %v82 = vsel %vm78, %v68, 0
    %vm83 = vsmask.f32 7424
    %v85 = vshrl.u32 %v79, 16
    %v87 = vshll.u32 %v79, 16
    %v89 = vrot.slane %v87, 1
    %v90 = vor.u32 %v85, %v89
    %v92 = vshll.u32 %v81, 16
    %v94 = vrot.slane %v92, 1
    %v95 = vsel %vm83, %v90, %v94
    %v97 = vshrl.u32 %v80, 16
    %v99 = vshll.u32 %v80, 16
    %v101 = vrot.slane %v99, 1
    %v102 = vor.u32 %v97, %v101
    %v104 = vshll.u32 %v82, 16
    %v106 = vrot.slane %v104, 1
    %v107 = vsel %vm83, %v102, %v106
    %108 = vrot.lane.b32.xlu0 %v95, 8
    %v109 = vpop.permute.xlu0 %108
    %110 = vrot.lane.b32.xlu0 %v107, 8
    %v111 = vpop.permute.xlu0 %110
    %vm116 = vcmask 1046528
    %v117 = vrot.slane %v79, 1
    %v118 = vrot.slane %v81, 1
    %v119 = vsel %vm116, %v117, %v118
    %v120 = vrot.slane %v80, 1
    %v121 = vrot.slane %v82, 1
    %v122 = vsel %vm116, %v120, %v121
    %123 = vrot.lane.b32.xlu0 %v119, 16
    %v124 = vpop.permute.xlu0 %123
    %125 = vrot.lane.b32.xlu0 %v122, 16
    %v126 = vpop.permute.xlu0 %125
    %vm127 = vcmask 64512
    %v129 = vsel %vm127, %v79, %v109
    %v131 = vsel %vm127, %v80, %v111
    %vm132 = vcmask 130048
    %v134 = vsel %vm132, %v129, %v124
    %v136 = vsel %vm132, %v131, %v126
    %v137 = vld [vmem:[%s1] sm:$0xf]
    %v138 = vld [vmem:[%s1 + $0x4] sm:$0xf]
    %v139 = vld [vmem:[%s1 + $0x8] sm:$0xf]
    %v140 = vld [vmem:[%s2] sm:$0x1]
    %v142 = vperm.slane %v140, 0
    %v147 = vunpack.c.l.b16 %v137
    %v148 = vunpack.c.l.b16 %v138
    %v149 = vunpack.c.l.b16 %v139
    %v150 = vpack.c.b16 %v148, %v147
    %v151 = vpack.c.b16 %v149, %v149
    %vm153 = vcmask 195584
    %v154 = vsel %vm153, %v134, 0
    %v156 = vsel %vm153, %v136, 0
    %vm158 = vcmask 1043456
    %v160 = vsel %vm158, %v151, 0
    %162 = vmatpush.bf16.msra.mxu0 0
    %163 = vmatpush.bf16.msra.mxu0 0
    %164 = vmatpush.bf16.msra.mxu0 0
    %165 = vmatpush.bf16.msra.mxu0 0
    %166 = vmatpush.bf16.msra.mxu0 0
    %167 = vmatpush.bf16.msra.mxu0 0
    %168 = vmatpush.bf16.msra.mxu0 %v160
    %169 = vmatpush.bf16.msra.mxu0 %v150
    %170 = vmatmul.bf16.gmra.mxu0 %v154
    %v171 = vpop.f32.mrf.mxu0
    %v172 = vadd.f32 %v142, %v171
    %v173 = vpop.f32.mrf.mxu0
    %v174 = vadd.f32 %v142, %v173
    %175 = vmatmul.bf16.gmra.mxu0 %v156
    %v176 = vpop.f32.mrf.mxu0
    %v177 = vadd.f32 %v142, %v176
    %v178 = vpop.f32.mrf.mxu0
    %v179 = vadd.f32 %v142, %v178
    %180 = vdwg.mxu0
    %v181 = vmax.f32 %v172, 0.0
    %v182 = vmax.f32 %v174, 0.0
    %v183 = vmax.f32 %v177, 0.0
    %v184 = vmax.f32 %v179, 0.0
    %v185 = vpack.c.bf16 %v181, %v181
    %v186 = vpack.c.bf16 %v182, %v182
    %v187 = vpack.c.bf16 %v183, %v183
    %v188 = vpack.c.bf16 %v184, %v184
    %v193 = vunpack.c.l.b16 %v185
    %v194 = vunpack.c.l.b16 %v186
    %v195 = vunpack.c.l.b16 %v187
    %v196 = vunpack.c.l.b16 %v188
    %v197 = vpack.c.b16 %v194, %v193
    %v198 = vpack.c.b16 %v196, %v195
    %v200 = vshrl.u32 %v197, 16
    %v202 = vrot.slane %v200, 7
    %v203 = vshll.u32 %v197, 16
    %v205 = vor.u32 %v202, %v203
    %v207 = vshrl.u32 %v198, 16
    %v209 = vrot.slane %v207, 7
    %v210 = vshll.u32 %v198, 16
    %v212 = vor.u32 %v209, %v210
    %v217 = vsel %vm78, 0, %v205
    %v218 = vsel %vm78, 0, %v212
    %v219 = vsel %vm78, %v202, 0
    %v220 = vsel %vm78, %v209, 0
    %v222 = vshrl.u32 %v217, 16
    %v224 = vshll.u32 %v217, 16
    %v226 = vrot.slane %v224, 1
    %v227 = vor.u32 %v222, %v226
    %v229 = vshll.u32 %v219, 16
    %v231 = vrot.slane %v229, 1
    %v232 = vsel %vm83, %v227, %v231
    %v234 = vshrl.u32 %v218, 16
    %v236 = vshll.u32 %v218, 16
    %v238 = vrot.slane %v236, 1
    %v239 = vor.u32 %v234, %v238
    %v241 = vshll.u32 %v220, 16
    %v243 = vrot.slane %v241, 1
    %v244 = vsel %vm83, %v239, %v243
    %245 = vrot.lane.b32.xlu0 %v232, 16
    %v246 = vpop.permute.xlu0 %245
    %247 = vrot.lane.b32.xlu0 %v244, 16
    %v248 = vpop.permute.xlu0 %247
    %v253 = vrot.slane %v217, 1
    %v254 = vrot.slane %v219, 1
    %v255 = vsel %vm116, %v253, %v254
    %v256 = vrot.slane %v218, 1
    %v257 = vrot.slane %v220, 1
    %v258 = vsel %vm116, %v256, %v257
    %259 = vrot.lane.b32.xlu0 %v255, 32
    %v260 = vpop.permute.xlu0 %259
    %261 = vrot.lane.b32.xlu0 %v258, 32
    %v262 = vpop.permute.xlu0 %261
    %v264 = vsel %vm132, %v217, %v246
    %v266 = vsel %vm132, %v218, %v248
    %vm267 = vcmask 261120
    %v269 = vsel %vm267, %v264, %v260
    %v271 = vsel %vm267, %v266, %v262
    %v272 = vld [vmem:[%s3] sm:$0xf]
    %v273 = vld [vmem:[%s3 + $0x4] sm:$0xf]
    %v274 = vld [vmem:[%s3 + $0x8] sm:$0xf]
    %v275 = vld [vmem:[%s3 + $0xc] sm:$0xf]
    %v276 = vld [vmem:[%s3 + $0x10] sm:$0xf]
    %v277 = vld [vmem:[%s3 + $0x14] sm:$0xf]
    %v278 = vld [vmem:[%s4] sm:$0x1]
    %v280 = vperm.slane %v278, 0
    %v288 = vunpack.c.l.b16 %v272
    %v289 = vunpack.c.l.b16 %v273
    %v290 = vunpack.c.l.b16 %v274
    %v291 = vunpack.c.l.b16 %v275
    %v292 = vunpack.c.l.b16 %v276
    %v293 = vunpack.c.l.b16 %v277
    %v294 = vpack.c.b16 %v289, %v288
    %v295 = vpack.c.b16 %v291, %v290
    %v296 = vpack.c.b16 %v293, %v292
    %vm300 = vcmask 392192
    %v301 = vsel %vm300, %v269, 0
    %v303 = vsel %vm300, %v271, 0
    %305 = vmatpush.bf16.msra.mxu0 0
    %306 = vmatpush.bf16.msra.mxu0 0
    %307 = vmatpush.bf16.msra.mxu0 0
    %308 = vmatpush.bf16.msra.mxu0 0
    %309 = vmatpush.bf16.msra.mxu0 0
    %310 = vmatpush.bf16.msra.mxu0 %v296
    %311 = vmatpush.bf16.msra.mxu0 %v295
    %312 = vmatpush.bf16.msra.mxu0 %v294
    %313 = vmatmul.bf16.gmra.mxu0 %v301
    %v314 = vpop.f32.mrf.mxu0
    %v315 = vadd.f32 %v280, %v314
    %v316 = vpop.f32.mrf.mxu0
    %v317 = vadd.f32 %v280, %v316
    %318 = vmatmul.bf16.gmra.mxu0 %v303
    %v319 = vpop.f32.mrf.mxu0
    %v320 = vadd.f32 %v280, %v319
    %v321 = vpop.f32.mrf.mxu0
    %v322 = vadd.f32 %v280, %v321
    %323 = vdwg.mxu0
    %v324 = vmax.f32 %v315, 0.0
    %v325 = vmax.f32 %v317, 0.0
    %v326 = vmax.f32 %v320, 0.0
    %v327 = vmax.f32 %v322, 0.0
    %v328 = vpack.c.bf16 %v324, %v324
    %v329 = vpack.c.bf16 %v325, %v325
    %v330 = vpack.c.bf16 %v326, %v326
    %v331 = vpack.c.bf16 %v327, %v327
    %v336 = vunpack.c.l.b16 %v328
    %v337 = vunpack.c.l.b16 %v329
    %v338 = vunpack.c.l.b16 %v330
    %v339 = vunpack.c.l.b16 %v331
    %v340 = vpack.c.b16 %v337, %v336
    %v341 = vpack.c.b16 %v339, %v338
    %v343 = vshrl.u32 %v340, 16
    %v345 = vrot.slane %v343, 7
    %v346 = vshll.u32 %v340, 16
    %v348 = vor.u32 %v345, %v346
    %v350 = vshrl.u32 %v341, 16
    %v352 = vrot.slane %v350, 7
    %v353 = vshll.u32 %v341, 16
    %v355 = vor.u32 %v352, %v353
    %v360 = vsel %vm78, 0, %v348
    %v361 = vsel %vm78, 0, %v355
    %v362 = vsel %vm78, %v345, 0
    %v363 = vsel %vm78, %v352, 0
    %v365 = vshrl.u32 %v360, 16
    %v367 = vshll.u32 %v360, 16
    %v369 = vrot.slane %v367, 1
    %v370 = vor.u32 %v365, %v369
    %v372 = vshll.u32 %v362, 16
    %v374 = vrot.slane %v372, 1
    %v375 = vsel %vm83, %v370, %v374
    %v377 = vshrl.u32 %v361, 16
    %v379 = vshll.u32 %v361, 16
    %v381 = vrot.slane %v379, 1
    %v382 = vor.u32 %v377, %v381
    %v384 = vshll.u32 %v363, 16
    %v386 = vrot.slane %v384, 1
    %v387 = vsel %vm83, %v382, %v386
    %v394 = vrot.slane %v360, 1
    %v395 = vrot.slane %v362, 1
    %v396 = vsel %vm116, %v394, %v395
    %v397 = vrot.slane %v361, 1
    %v398 = vrot.slane %v363, 1
    %v399 = vsel %vm116, %v397, %v398
    %v402 = vld [vmem:[#allocation2] sm:$0xf]
    %v403 = vld [vmem:[#allocation2 + $0x4] sm:$0xf]
    %v404 = vld [vmem:[#allocation2 + $0x8] sm:$0xf]
    %v405 = vld [vmem:[#allocation2 + $0xc] sm:$0xf]
    %v406 = vld [vmem:[#allocation2 + $0x10] sm:$0xf]
    %v407 = vld [vmem:[#allocation2 + $0x14] sm:$0xf]
    %v408 = vld [vmem:[#allocation2 + $0x18] sm:$0xf]
    %v409 = vld [vmem:[#allocation2 + $0x1c] sm:$0xf]
    %v410 = vld [vmem:[#allocation2 + $0x20] sm:$0xf]
    %v411 = vld [vmem:[#allocation2 + $0x24] sm:$0xf]
    %v412 = vld [vmem:[#allocation2 + $0x28] sm:$0xf]
    %v413 = vld [vmem:[#allocation2 + $0x2c] sm:$0xf]
    %v414 = vld [vmem:[#allocation2 + $0x30] sm:$0xf]
    %v415 = vld [vmem:[#allocation2 + $0x34] sm:$0xf]
    %v416 = vld [vmem:[#allocation2 + $0x38] sm:$0xf]
    %v417 = vld [vmem:[#allocation2 + $0x3c] sm:$0xf]
    %v418 = vld [vmem:[#allocation2 + $0x40] sm:$0xf]
    %v419 = vld [vmem:[#allocation2 + $0x44] sm:$0xf]
    %v420 = vld [vmem:[#allocation2 + $0x48] sm:$0xf]
    %v421 = vld [vmem:[#allocation2 + $0x4c] sm:$0xf]
    %v422 = vld [vmem:[#allocation2 + $0x50] sm:$0xf]
    %v423 = vld [vmem:[#allocation2 + $0x54] sm:$0xf]
    %v424 = vld [vmem:[#allocation2 + $0x58] sm:$0xf]
    %v425 = vld [vmem:[#allocation2 + $0x5c] sm:$0xf]
    %v426 = vld [vmem:[#allocation2 + $0x60] sm:$0xf]
    %v427 = vld [vmem:[#allocation2 + $0x64] sm:$0xf]
    %v428 = vld [vmem:[#allocation2 + $0x68] sm:$0xf]
    %v429 = vld [vmem:[#allocation2 + $0x6c] sm:$0xf]
    %v430 = vld [vmem:[#allocation2 + $0x70] sm:$0xf]
    %v431 = vld [vmem:[#allocation2 + $0x74] sm:$0xf]
    %v432 = vld [vmem:[#allocation2 + $0x78] sm:$0xf]
    %v433 = vld [vmem:[#allocation2 + $0x7c] sm:$0xf]
    %v434 = vld [vmem:[#allocation2 + $0x80] sm:$0xf]
    %v435 = vld [vmem:[#allocation2 + $0x84] sm:$0xf]
    %v436 = vld [vmem:[#allocation2 + $0x88] sm:$0xf]
    %v437 = vld [vmem:[#allocation2 + $0x8c] sm:$0xf]
    %v438 = vld [vmem:[#allocation2 + $0x90] sm:$0xf]
    %v439 = vld [vmem:[#allocation2 + $0x94] sm:$0xf]
    %v440 = vld [vmem:[#allocation2 + $0x98] sm:$0xf]
    %v441 = vld [vmem:[#allocation2 + $0x9c] sm:$0xf]
    %v442 = vld [vmem:[#allocation2 + $0xa0] sm:$0xf]
    %v443 = vld [vmem:[#allocation2 + $0xa4] sm:$0xf]
    %v444 = vld [vmem:[#allocation2 + $0xa8] sm:$0xf]
    %v445 = vld [vmem:[#allocation2 + $0xac] sm:$0xf]
    %v446 = vld [vmem:[#allocation2 + $0xb0] sm:$0xf]
    %v447 = vld [vmem:[#allocation2 + $0xb4] sm:$0xf]
    %v448 = vld [vmem:[#allocation2 + $0xb8] sm:$0xf]
    %v449 = vld [vmem:[#allocation2 + $0xbc] sm:$0xf]
    %v450 = vld [vmem:[%s6] sm:$0x1]
    %v452 = vperm.slane %v450, 0
    %v502 = vunpack.c.l.b16 %v402
    %v503 = vunpack.c.l.b16 %v403
    %v504 = vunpack.c.l.b16 %v404
    %v505 = vunpack.c.l.b16 %v405
    %v506 = vunpack.c.l.b16 %v406
    %v507 = vunpack.c.l.b16 %v407
    %v508 = vunpack.c.l.b16 %v408
    %v509 = vunpack.c.l.b16 %v409
    %v510 = vunpack.c.l.b16 %v410
    %v511 = vunpack.c.l.b16 %v411
    %v512 = vunpack.c.l.b16 %v412
    %v513 = vunpack.c.l.b16 %v413
    %v514 = vunpack.c.l.b16 %v414
    %v515 = vunpack.c.l.b16 %v415
    %v516 = vunpack.c.l.b16 %v416
    %v517 = vunpack.c.l.b16 %v417
    %v518 = vunpack.c.l.b16 %v418
    %v519 = vunpack.c.l.b16 %v419
    %v520 = vunpack.c.l.b16 %v420
    %v521 = vunpack.c.l.b16 %v421
    %v522 = vunpack.c.l.b16 %v422
    %v523 = vunpack.c.l.b16 %v423
    %v524 = vunpack.c.l.b16 %v424
    %v525 = vunpack.c.l.b16 %v425
    %v526 = vunpack.c.l.b16 %v426
    %v527 = vunpack.c.l.b16 %v427
    %v528 = vunpack.c.l.b16 %v428
    %v529 = vunpack.c.l.b16 %v429
    %v530 = vunpack.c.l.b16 %v430
    %v531 = vunpack.c.l.b16 %v431
    %v532 = vunpack.c.l.b16 %v432
    %v533 = vunpack.c.l.b16 %v433
    %v534 = vunpack.c.l.b16 %v434
    %v535 = vunpack.c.l.b16 %v435
    %v536 = vunpack.c.l.b16 %v436
    %v537 = vunpack.c.l.b16 %v437
    %v538 = vunpack.c.l.b16 %v438
    %v539 = vunpack.c.l.b16 %v439
    %v540 = vunpack.c.l.b16 %v440
    %v541 = vunpack.c.l.b16 %v441
    %v542 = vunpack.c.l.b16 %v442
    %v543 = vunpack.c.l.b16 %v443
    %v544 = vunpack.c.l.b16 %v444
    %v545 = vunpack.c.l.b16 %v445
    %v546 = vunpack.c.l.b16 %v446
    %v547 = vunpack.c.l.b16 %v447
    %v548 = vunpack.c.l.b16 %v448
    %v549 = vunpack.c.l.b16 %v449
    %v550 = vpack.c.b16 %v503, %v502
    %v551 = vpack.c.b16 %v505, %v504
    %v552 = vpack.c.b16 %v507, %v506
    %v553 = vpack.c.b16 %v509, %v508
    %v554 = vpack.c.b16 %v511, %v510
    %v555 = vpack.c.b16 %v513, %v512
    %v556 = vpack.c.b16 %v515, %v514
    %v557 = vpack.c.b16 %v517, %v516
    %v558 = vpack.c.b16 %v519, %v518
    %v559 = vpack.c.b16 %v521, %v520
    %v560 = vpack.c.b16 %v523, %v522
    %v561 = vpack.c.b16 %v525, %v524
    %v562 = vpack.c.b16 %v527, %v526
    %v563 = vpack.c.b16 %v529, %v528
    %v564 = vpack.c.b16 %v531, %v530
    %v565 = vpack.c.b16 %v533, %v532
    %v566 = vpack.c.b16 %v535, %v534
    %v567 = vpack.c.b16 %v537, %v536
    %v568 = vpack.c.b16 %v539, %v538
    %v569 = vpack.c.b16 %v541, %v540
    %v570 = vpack.c.b16 %v543, %v542
    %v571 = vpack.c.b16 %v545, %v544
    %v572 = vpack.c.b16 %v547, %v546
    %v573 = vpack.c.b16 %v549, %v548
    %598 = vmatpush.bf16.msra.mxu0 %v557
    %599 = vmatpush.bf16.msra.mxu0 %v556
    %600 = vmatpush.bf16.msra.mxu0 %v555
    %601 = vmatpush.bf16.msra.mxu0 %v554
    %602 = vmatpush.bf16.msra.mxu0 %v553
    %603 = vmatpush.bf16.msra.mxu0 %v552
    %604 = vmatpush.bf16.msra.mxu0 %v551
    %605 = vmatpush.bf16.msra.mxu0 %v550
    %606 = vmatmul.bf16.gmra.mxu0 %v360
    %v607 = vpop.f32.mrf.mxu0
    %v608 = vadd.f32 %v452, %v607
    %v609 = vpop.f32.mrf.mxu0
    %v610 = vadd.f32 %v452, %v609
    %611 = vmatmul.bf16.gmra.mxu0 %v361
    %v612 = vpop.f32.mrf.mxu0
    %v613 = vadd.f32 %v452, %v612
    %v614 = vpop.f32.mrf.mxu0
    %v615 = vadd.f32 %v452, %v614
    %616 = vdwg.mxu0
    %617 = vmatpush.bf16.msra.mxu0 %v565
    %618 = vmatpush.bf16.msra.mxu0 %v564
    %619 = vmatpush.bf16.msra.mxu0 %v563
    %620 = vmatpush.bf16.msra.mxu0 %v562
    %621 = vmatpush.bf16.msra.mxu0 %v561
    %622 = vmatpush.bf16.msra.mxu0 %v560
    %623 = vmatpush.bf16.msra.mxu0 %v559
    %624 = vmatpush.bf16.msra.mxu0 %v558
    %625 = vmatmul.bf16.gmra.mxu0 %v375
    %v626 = vpop.f32.mrf.mxu0
    %v627 = vadd.f32 %v608, %v626
    %v628 = vpop.f32.mrf.mxu0
    %v629 = vadd.f32 %v610, %v628
    %630 = vmatmul.bf16.gmra.mxu0 %v387
    %v631 = vpop.f32.mrf.mxu0
    %v632 = vadd.f32 %v613, %v631
    %v633 = vpop.f32.mrf.mxu0
    %v634 = vadd.f32 %v615, %v633
    %635 = vdwg.mxu0
    %636 = vmatpush.bf16.msra.mxu0 %v573
    %637 = vmatpush.bf16.msra.mxu0 %v572
    %638 = vmatpush.bf16.msra.mxu0 %v571
    %639 = vmatpush.bf16.msra.mxu0 %v570
    %640 = vmatpush.bf16.msra.mxu0 %v569
    %641 = vmatpush.bf16.msra.mxu0 %v568
    %642 = vmatpush.bf16.msra.mxu0 %v567
    %643 = vmatpush.bf16.msra.mxu0 %v566
    %644 = vmatmul.bf16.gmra.mxu0 %v396
    %v645 = vpop.f32.mrf.mxu0
    %v646 = vadd.f32 %v627, %v645
    %v647 = vpop.f32.mrf.mxu0
    %v648 = vadd.f32 %v629, %v647
    %649 = vmatmul.bf16.gmra.mxu0 %v399
    %v650 = vpop.f32.mrf.mxu0
    %v651 = vadd.f32 %v632, %v650
    %v652 = vpop.f32.mrf.mxu0
    %v653 = vadd.f32 %v634, %v652
    %654 = vdwg.mxu0
    %v655 = vxor.u32 %v646, 2147483648
    %v656 = vxor.u32 %v648, 2147483648
    %v657 = vxor.u32 %v651, 2147483648
    %v658 = vxor.u32 %v653, 2147483648
    %v659 = vmul.f32 %v655, 1.442695
    %v660 = vpow.pop %v659
    %v661 = vmul.f32 %v656, 1.442695
    %v662 = vpow.pop %v661
    %v663 = vmul.f32 %v657, 1.442695
    %v664 = vpow.pop %v663
    %v665 = vmul.f32 %v658, 1.442695
    %v666 = vpow.pop %v665
    %v667 = vadd.f32 %v660, 1.0
    %v668 = vadd.f32 %v662, 1.0
    %v669 = vadd.f32 %v664, 1.0
    %v670 = vadd.f32 %v666, 1.0
    %v671 = vrcp.pop %v667
    %v672 = vmul.f32 %v667, %v671
    %v673 = vsub.f32 1.0, %v672
    %v674 = vmul.f32 %v671, %v673
    %v675 = vadd.f32 %v671, %v674
    %vm676 = vweird.f32 %v667
    %vm677 = vweird.f32 %v671
    %vm678 = vmor %vm676, %vm677
    %v679 = vsel %vm678, %v671, %v675
    %v680 = vand.u32 2147483647, %v667
    %vm681 = vcmp.eq.f32.partialorder %v680, 8.507059e+37
    %v682 = vand.u32 %v667, 2147483648
    %v683 = vor.u32 1.1754944e-38, %v682
    %v684 = vsel %vm681, %v683, %v679
    %v685 = vmul.f32 1.0, %v684
    %v686 = vrcp.pop %v668
    %v687 = vmul.f32 %v668, %v686
    %v688 = vsub.f32 1.0, %v687
    %v689 = vmul.f32 %v686, %v688
    %v690 = vadd.f32 %v686, %v689
    %vm691 = vweird.f32 %v668
    %vm692 = vweird.f32 %v686
    %vm693 = vmor %vm691, %vm692
    %v694 = vsel %vm693, %v686, %v690
    %v695 = vand.u32 2147483647, %v668
    %vm696 = vcmp.eq.f32.partialorder %v695, 8.507059e+37
    %v697 = vand.u32 %v668, 2147483648
    %v698 = vor.u32 1.1754944e-38, %v697
    %v699 = vsel %vm696, %v698, %v694
    %v700 = vmul.f32 1.0, %v699
    %v701 = vrcp.pop %v669
    %v702 = vmul.f32 %v669, %v701
    %v703 = vsub.f32 1.0, %v702
    %v704 = vmul.f32 %v701, %v703
    %v705 = vadd.f32 %v701, %v704
    %vm706 = vweird.f32 %v669
    %vm707 = vweird.f32 %v701
    %vm708 = vmor %vm706, %vm707
    %v709 = vsel %vm708, %v701, %v705
    %v710 = vand.u32 2147483647, %v669
    %vm711 = vcmp.eq.f32.partialorder %v710, 8.507059e+37
    %v712 = vand.u32 %v669, 2147483648
    %v713 = vor.u32 1.1754944e-38, %v712
    %v714 = vsel %vm711, %v713, %v709
    %v715 = vmul.f32 1.0, %v714
    %v716 = vrcp.pop %v670
    %v717 = vmul.f32 %v670, %v716
    %v718 = vsub.f32 1.0, %v717
    %v719 = vmul.f32 %v716, %v718
    %v720 = vadd.f32 %v716, %v719
    %vm721 = vweird.f32 %v670
    %vm722 = vweird.f32 %v716
    %vm723 = vmor %vm721, %vm722
    %v724 = vsel %vm723, %v716, %v720
    %v725 = vand.u32 2147483647, %v670
    %vm726 = vcmp.eq.f32.partialorder %v725, 8.507059e+37
    %v727 = vand.u32 %v670, 2147483648
    %v728 = vor.u32 1.1754944e-38, %v727
    %v729 = vsel %vm726, %v728, %v724
    %v730 = vmul.f32 1.0, %v729
    %731 = vst [vmem:[#allocation5] sm:$0xff] %v685
    %732 = vst [vmem:[#allocation5 + $0x8] sm:$0xff] %v700
    %733 = vst [vmem:[#allocation5 + $0x10] sm:$0xff] %v715
    %734 = vst [vmem:[#allocation5 + $0x18] sm:$0xff] %v730
    // Predicated region
    $region34: #{tpu_custom_call.1} parent=1 // pred_check
      _
    $region35: #{tpu_custom_call.1} parent=1 // pred_check_branch
      %736 = sbr.rel (0) target = $region37
    $region36: #{tpu_custom_call.1} parent=1 // pred_region
      %738 = vsyncadd [#allocation4], 0
      %s739 = sshll.u32 [#allocation5], 4
      %s740 = int_to_ptr.vmem [resolvable:$true] %s739
      %s741 = sshll.u32 %s7, 4
      %s742 = int_to_ptr.hbm [resolvable:$true] %s741
      %747 = dma.vmem_to_hbm [thread:$0]  %s740, 512, %s742, [#allocation4], 128, 128, 8
    $region37: #{tpu_custom_call.1} parent=1 // pred_fallthru
      _
    // Predicated region
    $region38: #{tpu_custom_call.1} parent=1 // pred_check
      _
    $region39: #{tpu_custom_call.1} parent=1 // pred_check_branch
      %749 = sbr.rel (0) target = $region41
    $region40: #{tpu_custom_call.1} parent=1 // pred_region
      %751 = dma.done [#allocation4], 512
    $region41: #{tpu_custom_call.1} parent=1 // pred_fallthru
      _
    %752 = vsyncpa [#allocation3], 1
    %753 = vsyncpa [#allocation4], 1

</llo_original>
